<compile_context>
chip_gen: v7x
topology: tpu7x:2x2x1
jax: 0.10.0
libtpu: 0.0.40
codegen_flags: <defaults>
</compile_context>

<pallas_src>
import functools

import jax
import jax.numpy as jnp
from jax.experimental import pallas as pl
from jax.experimental.pallas import tpu as pltpu

D_INPUT = 23
D_INNER = 100
D_OUT = 1
N_LAYERS = 10
LANE = 128  # padded feature width (lane dimension)


def _round_up(x, m):
    return ((x + m - 1) // m) * m


def deep_regression_kernel(x_ref, w_in_ref, b_in_ref,
                           w_f_ref, b_f_ref,
                           w_out_ref, b_out_ref, o_ref):
    # Input layer: (TILE_B, 128) @ (128, 128) + (1, 128)   [zero-padded beyond 23/100]
    h = jnp.dot(x_ref[...], w_in_ref[...],
                preferred_element_type=jnp.float32) + b_in_ref[...]

    # Fused residual mixes: x = x @ (W[i//2] + W[i]) + (b[i//2] + b[i])
    # 10 serial (TILE_B,128)x(128,128) matmuls (was 20 before fusion). Statically unrolled.
    for i in range(N_LAYERS):
        h = jnp.dot(h, w_f_ref[i],
                    preferred_element_type=jnp.float32) + b_f_ref[i]

    # Output layer, lane-dense: only lane 0 of the 128-wide slab is the real output.
    o_ref[...] = jnp.dot(h, w_out_ref[...],
                         preferred_element_type=jnp.float32) + b_out_ref[...]


def _prepare_params(params):
    """Fuse each residual pair and zero-pad everything to 128-wide slabs."""
    w_in, b_in, w_stack, b_stack, w_out, b_out = params
    f32 = jnp.float32

    # Pair fusion (batch independent): W_fused[i] = W[i//2] + W[i]
    idx_j = jnp.array([i // 2 for i in range(N_LAYERS)], dtype=jnp.int32)
    w_fused_raw = w_stack[idx_j] + w_stack          # (10, 100, 100)
    b_fused_raw = b_stack[idx_j] + b_stack          # (10, 1, 100)

    w_in_p = jnp.zeros((LANE, LANE), f32).at[:D_INPUT, :D_INNER].set(w_in)
    b_in_p = jnp.zeros((1, LANE), f32).at[:, :D_INNER].set(b_in)
    w_f_p = jnp.zeros((N_LAYERS, LANE, LANE), f32).at[:, :D_INNER, :D_INNER].set(w_fused_raw)
    b_f_p = jnp.zeros((N_LAYERS, 1, LANE), f32).at[:, :, :D_INNER].set(b_fused_raw)
    w_out_p = jnp.zeros((LANE, LANE), f32).at[:D_INNER, :D_OUT].set(w_out)
    b_out_p = jnp.zeros((1, LANE), f32).at[:, :D_OUT].set(b_out)
    return w_in_p, b_in_p, w_f_p, b_f_p, w_out_p, b_out_p


@functools.partial(jax.jit, static_argnames=("tile_b",))
def deep_regression(x, params, tile_b=256):
    """x: (B, 23) float32, params: raw (PyTorch-shaped, transposed) parameter tuple."""
    w_in_p, b_in_p, w_f_p, b_f_p, w_out_p, b_out_p = _prepare_params(params)

    B = x.shape[0]
    # Clamp the batch tile for small problems; keep it a multiple of 8 (sublanes).
    tile_b = min(tile_b, _round_up(max(B, 8), 8))
    num_blocks = pl.cdiv(B, tile_b)
    b_pad = num_blocks * tile_b

    # Zero-pad the activations to (B_pad, 128): full unmasked vregs into the MXU.
    x_pad = jnp.zeros((b_pad, LANE), jnp.float32).at[:B, :D_INPUT].set(x)

    # Weights/biases stay VMEM-resident: index_map always returns block 0, so the
    # repeated DMA across batch grid steps is elided.
    def resident(shape):
        return pl.BlockSpec(shape, lambda b: tuple(0 for _ in shape))

    out_pad = pl.pallas_call(
        deep_regression_kernel,
        out_shape=jax.ShapeDtypeStruct((b_pad, LANE), jnp.float32),
        grid=(num_blocks,),
        in_specs=[
            pl.BlockSpec((tile_b, LANE), lambda b: (b, 0)),   # x tile
            resident(w_in_p.shape),
            resident(b_in_p.shape),
            resident(w_f_p.shape),
            resident(b_f_p.shape),
            resident(w_out_p.shape),
            resident(b_out_p.shape),
        ],
        out_specs=pl.BlockSpec((tile_b, LANE), lambda b: (b, 0)),
        compiler_params=pltpu.CompilerParams(
            dimension_semantics=("parallel",),   # shard batch tiles across TCs on v7x
        ),
    )(x_pad, w_in_p, b_in_p, w_f_p, b_f_p, w_out_p, b_out_p)

    # Slice back to the real batch and the single real output lane.
    return out_pad[:B, :D_OUT]


def init_params(key):
    """Deterministic init mimicking nn.Linear's uniform(-1/sqrt(fan_in), 1/sqrt(fan_in))."""
    ks = jax.random.split(key, 6)

    def lin(k, fan_in, fan_out):
        kw, kb = jax.random.split(k)
        bound = 1.0 / jnp.sqrt(fan_in)
        # stored transposed: (in, out)
        w = jax.random.uniform(kw, (fan_in, fan_out), jnp.float32, -bound, bound)
        b = jax.random.uniform(kb, (1, fan_out), jnp.float32, -bound, bound)
        return w, b

    w_in, b_in = lin(ks[0], D_INPUT, D_INNER)

    layer_keys = jax.random.split(ks[1], N_LAYERS)
    ws, bs = [], []
    for lk in layer_keys:
        w, b = lin(lk, D_INNER, D_INNER)
        ws.append(w)
        bs.append(b)
    w_stack = jnp.stack(ws, axis=0)          # (10, 100, 100)
    b_stack = jnp.stack(bs, axis=0)          # (10, 1, 100)

    w_out, b_out = lin(ks[2], D_INNER, D_OUT)
    return w_in, b_in, w_stack, b_stack, w_out, b_out


def reference_forward(x, params):
    """Pure-JAX reference, faithful to the PyTorch forward (no fusion, no padding)."""
    w_in, b_in, w_stack, b_stack, w_out, b_out = params
    h = x @ w_in + b_in
    for i in range(N_LAYERS):
        j = i // 2
        h = (h @ w_stack[j] + b_stack[j]) + (h @ w_stack[i] + b_stack[i])
    return h @ w_out + b_out


if __name__ == "__main__":
    key = jax.random.PRNGKey(0)
    k_x, k_p = jax.random.split(key)

    B = 8
    x = jax.random.normal(k_x, (B, D_INPUT), dtype=jnp.float32)
    params = init_params(k_p)

    out = deep_regression(x, params)
    out = jax.block_until_ready(out)

    ref = reference_forward(x, params)
    assert out.shape == (B, D_OUT)
    assert jnp.allclose(out, ref, rtol=1e-4, atol=1e-4), (out, ref)

    print("KERNEL_OK")
</pallas_src>

<mosaic_0001>
module attributes {stable_mosaic.version = 11 : i64} {
  func.func @deep_regression_kernel(%arg0: i32, %arg1: memref<8x128xf32, #tpu.memory_space<vmem>>, %arg2: memref<128x128xf32, #tpu.memory_space<vmem>>, %arg3: memref<1x128xf32, #tpu.memory_space<vmem>>, %arg4: memref<10x128x128xf32, #tpu.memory_space<vmem>>, %arg5: memref<10x1x128xf32, #tpu.memory_space<vmem>>, %arg6: memref<128x128xf32, #tpu.memory_space<vmem>>, %arg7: memref<1x128xf32, #tpu.memory_space<vmem>>, %arg8: memref<8x128xf32, #tpu.memory_space<vmem>>) attributes {dimension_semantics = [#tpu.dimension_semantics<parallel>], iteration_bounds = array<i64: 1>, scalar_prefetch = 0 : i64, scratch_operands = 0 : i64, tpu.core_type = #tpu.core_type<tc>, window_params = [{transform_indices = @transform_0, window_bounds = array<i64: 8, 128>}, {pipeline_mode = #tpu.pipeline_mode<synchronous>, transform_indices = @transform_1, window_bounds = array<i64: 128, 128>}, {pipeline_mode = #tpu.pipeline_mode<synchronous>, transform_indices = @transform_2, window_bounds = array<i64: 1, 128>}, {pipeline_mode = #tpu.pipeline_mode<synchronous>, transform_indices = @transform_3, window_bounds = array<i64: 10, 128, 128>}, {pipeline_mode = #tpu.pipeline_mode<synchronous>, transform_indices = @transform_4, window_bounds = array<i64: 10, 1, 128>}, {pipeline_mode = #tpu.pipeline_mode<synchronous>, transform_indices = @transform_5, window_bounds = array<i64: 128, 128>}, {pipeline_mode = #tpu.pipeline_mode<synchronous>, transform_indices = @transform_6, window_bounds = array<i64: 1, 128>}, {transform_indices = @transform_7, window_bounds = array<i64: 8, 128>}]} {
    %c0 = arith.constant 0 : index
    %c0_0 = arith.constant 0 : index
    %0 = vector.load %arg1[%c0, %c0_0] : memref<8x128xf32, #tpu.memory_space<vmem>>, vector<8x128xf32>
    %c0_1 = arith.constant 0 : index
    %c0_2 = arith.constant 0 : index
    %1 = vector.load %arg2[%c0_1, %c0_2] : memref<128x128xf32, #tpu.memory_space<vmem>>, vector<128x128xf32>
    %cst = arith.constant dense<0.000000e+00> : vector<8x128xf32>
    %2 = tpu.matmul %0, %1, %cst {dimension_numbers = #tpu.dot_dimension_numbers<[1], [0], [0], [1], [0, 0, 1, 1], [], []>} : vector<8x128xf32>, vector<128x128xf32>, vector<8x128xf32> -> vector<8x128xf32>
    %c0_3 = arith.constant 0 : index
    %c0_4 = arith.constant 0 : index
    %3 = vector.load %arg3[%c0_3, %c0_4] : memref<1x128xf32, #tpu.memory_space<vmem>>, vector<1x128xf32>
    %4 = vector.broadcast %3 : vector<1x128xf32> to vector<8x128xf32>
    %5 = arith.addf %2, %4 : vector<8x128xf32>
    %c0_5 = arith.constant 0 : index
    %c0_6 = arith.constant 0 : index
    %c0_7 = arith.constant 0 : index
    %6 = vector.load %arg4[%c0_5, %c0_6, %c0_7] : memref<10x128x128xf32, #tpu.memory_space<vmem>>, vector<1x128x128xf32>
    %7 = vector.shape_cast %6 : vector<1x128x128xf32> to vector<128x128xf32>
    %cst_8 = arith.constant dense<0.000000e+00> : vector<8x128xf32>
    %8 = tpu.matmul %5, %7, %cst_8 {dimension_numbers = #tpu.dot_dimension_numbers<[1], [0], [0], [1], [0, 0, 1, 1], [], []>} : vector<8x128xf32>, vector<128x128xf32>, vector<8x128xf32> -> vector<8x128xf32>
    %c0_9 = arith.constant 0 : index
    %c0_10 = arith.constant 0 : index
    %c0_11 = arith.constant 0 : index
    %9 = vector.load %arg5[%c0_9, %c0_10, %c0_11] : memref<10x1x128xf32, #tpu.memory_space<vmem>>, vector<1x1x128xf32>
    %10 = vector.shape_cast %9 : vector<1x1x128xf32> to vector<1x128xf32>
    %11 = vector.broadcast %10 : vector<1x128xf32> to vector<8x128xf32>
    %12 = arith.addf %8, %11 : vector<8x128xf32>
    %c1 = arith.constant 1 : index
    %c0_12 = arith.constant 0 : index
    %c0_13 = arith.constant 0 : index
    %13 = vector.load %arg4[%c1, %c0_12, %c0_13] : memref<10x128x128xf32, #tpu.memory_space<vmem>>, vector<1x128x128xf32>
    %14 = vector.shape_cast %13 : vector<1x128x128xf32> to vector<128x128xf32>
    %cst_14 = arith.constant dense<0.000000e+00> : vector<8x128xf32>
    %15 = tpu.matmul %12, %14, %cst_14 {dimension_numbers = #tpu.dot_dimension_numbers<[1], [0], [0], [1], [0, 0, 1, 1], [], []>} : vector<8x128xf32>, vector<128x128xf32>, vector<8x128xf32> -> vector<8x128xf32>
    %c1_15 = arith.constant 1 : index
    %c0_16 = arith.constant 0 : index
    %c0_17 = arith.constant 0 : index
    %16 = vector.load %arg5[%c1_15, %c0_16, %c0_17] : memref<10x1x128xf32, #tpu.memory_space<vmem>>, vector<1x1x128xf32>
    %17 = vector.shape_cast %16 : vector<1x1x128xf32> to vector<1x128xf32>
    %18 = vector.broadcast %17 : vector<1x128xf32> to vector<8x128xf32>
    %19 = arith.addf %15, %18 : vector<8x128xf32>
    %c2 = arith.constant 2 : index
    %c0_18 = arith.constant 0 : index
    %c0_19 = arith.constant 0 : index
    %20 = vector.load %arg4[%c2, %c0_18, %c0_19] : memref<10x128x128xf32, #tpu.memory_space<vmem>>, vector<1x128x128xf32>
    %21 = vector.shape_cast %20 : vector<1x128x128xf32> to vector<128x128xf32>
    %cst_20 = arith.constant dense<0.000000e+00> : vector<8x128xf32>
    %22 = tpu.matmul %19, %21, %cst_20 {dimension_numbers = #tpu.dot_dimension_numbers<[1], [0], [0], [1], [0, 0, 1, 1], [], []>} : vector<8x128xf32>, vector<128x128xf32>, vector<8x128xf32> -> vector<8x128xf32>
    %c2_21 = arith.constant 2 : index
    %c0_22 = arith.constant 0 : index
    %c0_23 = arith.constant 0 : index
    %23 = vector.load %arg5[%c2_21, %c0_22, %c0_23] : memref<10x1x128xf32, #tpu.memory_space<vmem>>, vector<1x1x128xf32>
    %24 = vector.shape_cast %23 : vector<1x1x128xf32> to vector<1x128xf32>
    %25 = vector.broadcast %24 : vector<1x128xf32> to vector<8x128xf32>
    %26 = arith.addf %22, %25 : vector<8x128xf32>
    %c3 = arith.constant 3 : index
    %c0_24 = arith.constant 0 : index
    %c0_25 = arith.constant 0 : index
    %27 = vector.load %arg4[%c3, %c0_24, %c0_25] : memref<10x128x128xf32, #tpu.memory_space<vmem>>, vector<1x128x128xf32>
    %28 = vector.shape_cast %27 : vector<1x128x128xf32> to vector<128x128xf32>
    %cst_26 = arith.constant dense<0.000000e+00> : vector<8x128xf32>
    %29 = tpu.matmul %26, %28, %cst_26 {dimension_numbers = #tpu.dot_dimension_numbers<[1], [0], [0], [1], [0, 0, 1, 1], [], []>} : vector<8x128xf32>, vector<128x128xf32>, vector<8x128xf32> -> vector<8x128xf32>
    %c3_27 = arith.constant 3 : index
    %c0_28 = arith.constant 0 : index
    %c0_29 = arith.constant 0 : index
    %30 = vector.load %arg5[%c3_27, %c0_28, %c0_29] : memref<10x1x128xf32, #tpu.memory_space<vmem>>, vector<1x1x128xf32>
    %31 = vector.shape_cast %30 : vector<1x1x128xf32> to vector<1x128xf32>
    %32 = vector.broadcast %31 : vector<1x128xf32> to vector<8x128xf32>
    %33 = arith.addf %29, %32 : vector<8x128xf32>
    %c4 = arith.constant 4 : index
    %c0_30 = arith.constant 0 : index
    %c0_31 = arith.constant 0 : index
    %34 = vector.load %arg4[%c4, %c0_30, %c0_31] : memref<10x128x128xf32, #tpu.memory_space<vmem>>, vector<1x128x128xf32>
    %35 = vector.shape_cast %34 : vector<1x128x128xf32> to vector<128x128xf32>
    %cst_32 = arith.constant dense<0.000000e+00> : vector<8x128xf32>
    %36 = tpu.matmul %33, %35, %cst_32 {dimension_numbers = #tpu.dot_dimension_numbers<[1], [0], [0], [1], [0, 0, 1, 1], [], []>} : vector<8x128xf32>, vector<128x128xf32>, vector<8x128xf32> -> vector<8x128xf32>
    %c4_33 = arith.constant 4 : index
    %c0_34 = arith.constant 0 : index
    %c0_35 = arith.constant 0 : index
    %37 = vector.load %arg5[%c4_33, %c0_34, %c0_35] : memref<10x1x128xf32, #tpu.memory_space<vmem>>, vector<1x1x128xf32>
    %38 = vector.shape_cast %37 : vector<1x1x128xf32> to vector<1x128xf32>
    %39 = vector.broadcast %38 : vector<1x128xf32> to vector<8x128xf32>
    %40 = arith.addf %36, %39 : vector<8x128xf32>
    %c5 = arith.constant 5 : index
    %c0_36 = arith.constant 0 : index
    %c0_37 = arith.constant 0 : index
    %41 = vector.load %arg4[%c5, %c0_36, %c0_37] : memref<10x128x128xf32, #tpu.memory_space<vmem>>, vector<1x128x128xf32>
    %42 = vector.shape_cast %41 : vector<1x128x128xf32> to vector<128x128xf32>
    %cst_38 = arith.constant dense<0.000000e+00> : vector<8x128xf32>
    %43 = tpu.matmul %40, %42, %cst_38 {dimension_numbers = #tpu.dot_dimension_numbers<[1], [0], [0], [1], [0, 0, 1, 1], [], []>} : vector<8x128xf32>, vector<128x128xf32>, vector<8x128xf32> -> vector<8x128xf32>
    %c5_39 = arith.constant 5 : index
    %c0_40 = arith.constant 0 : index
    %c0_41 = arith.constant 0 : index
    %44 = vector.load %arg5[%c5_39, %c0_40, %c0_41] : memref<10x1x128xf32, #tpu.memory_space<vmem>>, vector<1x1x128xf32>
    %45 = vector.shape_cast %44 : vector<1x1x128xf32> to vector<1x128xf32>
    %46 = vector.broadcast %45 : vector<1x128xf32> to vector<8x128xf32>
    %47 = arith.addf %43, %46 : vector<8x128xf32>
    %c6 = arith.constant 6 : index
    %c0_42 = arith.constant 0 : index
    %c0_43 = arith.constant 0 : index
    %48 = vector.load %arg4[%c6, %c0_42, %c0_43] : memref<10x128x128xf32, #tpu.memory_space<vmem>>, vector<1x128x128xf32>
    %49 = vector.shape_cast %48 : vector<1x128x128xf32> to vector<128x128xf32>
    %cst_44 = arith.constant dense<0.000000e+00> : vector<8x128xf32>
    %50 = tpu.matmul %47, %49, %cst_44 {dimension_numbers = #tpu.dot_dimension_numbers<[1], [0], [0], [1], [0, 0, 1, 1], [], []>} : vector<8x128xf32>, vector<128x128xf32>, vector<8x128xf32> -> vector<8x128xf32>
    %c6_45 = arith.constant 6 : index
    %c0_46 = arith.constant 0 : index
    %c0_47 = arith.constant 0 : index
    %51 = vector.load %arg5[%c6_45, %c0_46, %c0_47] : memref<10x1x128xf32, #tpu.memory_space<vmem>>, vector<1x1x128xf32>
    %52 = vector.shape_cast %51 : vector<1x1x128xf32> to vector<1x128xf32>
    %53 = vector.broadcast %52 : vector<1x128xf32> to vector<8x128xf32>
    %54 = arith.addf %50, %53 : vector<8x128xf32>
    %c7 = arith.constant 7 : index
    %c0_48 = arith.constant 0 : index
    %c0_49 = arith.constant 0 : index
    %55 = vector.load %arg4[%c7, %c0_48, %c0_49] : memref<10x128x128xf32, #tpu.memory_space<vmem>>, vector<1x128x128xf32>
    %56 = vector.shape_cast %55 : vector<1x128x128xf32> to vector<128x128xf32>
    %cst_50 = arith.constant dense<0.000000e+00> : vector<8x128xf32>
    %57 = tpu.matmul %54, %56, %cst_50 {dimension_numbers = #tpu.dot_dimension_numbers<[1], [0], [0], [1], [0, 0, 1, 1], [], []>} : vector<8x128xf32>, vector<128x128xf32>, vector<8x128xf32> -> vector<8x128xf32>
    %c7_51 = arith.constant 7 : index
    %c0_52 = arith.constant 0 : index
    %c0_53 = arith.constant 0 : index
    %58 = vector.load %arg5[%c7_51, %c0_52, %c0_53] : memref<10x1x128xf32, #tpu.memory_space<vmem>>, vector<1x1x128xf32>
    %59 = vector.shape_cast %58 : vector<1x1x128xf32> to vector<1x128xf32>
    %60 = vector.broadcast %59 : vector<1x128xf32> to vector<8x128xf32>
    %61 = arith.addf %57, %60 : vector<8x128xf32>
    %c8 = arith.constant 8 : index
    %c0_54 = arith.constant 0 : index
    %c0_55 = arith.constant 0 : index
    %62 = vector.load %arg4[%c8, %c0_54, %c0_55] : memref<10x128x128xf32, #tpu.memory_space<vmem>>, vector<1x128x128xf32>
    %63 = vector.shape_cast %62 : vector<1x128x128xf32> to vector<128x128xf32>
    %cst_56 = arith.constant dense<0.000000e+00> : vector<8x128xf32>
    %64 = tpu.matmul %61, %63, %cst_56 {dimension_numbers = #tpu.dot_dimension_numbers<[1], [0], [0], [1], [0, 0, 1, 1], [], []>} : vector<8x128xf32>, vector<128x128xf32>, vector<8x128xf32> -> vector<8x128xf32>
    %c8_57 = arith.constant 8 : index
    %c0_58 = arith.constant 0 : index
    %c0_59 = arith.constant 0 : index
    %65 = vector.load %arg5[%c8_57, %c0_58, %c0_59] : memref<10x1x128xf32, #tpu.memory_space<vmem>>, vector<1x1x128xf32>
    %66 = vector.shape_cast %65 : vector<1x1x128xf32> to vector<1x128xf32>
    %67 = vector.broadcast %66 : vector<1x128xf32> to vector<8x128xf32>
    %68 = arith.addf %64, %67 : vector<8x128xf32>
    %c9 = arith.constant 9 : index
    %c0_60 = arith.constant 0 : index
    %c0_61 = arith.constant 0 : index
    %69 = vector.load %arg4[%c9, %c0_60, %c0_61] : memref<10x128x128xf32, #tpu.memory_space<vmem>>, vector<1x128x128xf32>
    %70 = vector.shape_cast %69 : vector<1x128x128xf32> to vector<128x128xf32>
    %cst_62 = arith.constant dense<0.000000e+00> : vector<8x128xf32>
    %71 = tpu.matmul %68, %70, %cst_62 {dimension_numbers = #tpu.dot_dimension_numbers<[1], [0], [0], [1], [0, 0, 1, 1], [], []>} : vector<8x128xf32>, vector<128x128xf32>, vector<8x128xf32> -> vector<8x128xf32>
    %c9_63 = arith.constant 9 : index
    %c0_64 = arith.constant 0 : index
    %c0_65 = arith.constant 0 : index
    %72 = vector.load %arg5[%c9_63, %c0_64, %c0_65] : memref<10x1x128xf32, #tpu.memory_space<vmem>>, vector<1x1x128xf32>
    %73 = vector.shape_cast %72 : vector<1x1x128xf32> to vector<1x128xf32>
    %74 = vector.broadcast %73 : vector<1x128xf32> to vector<8x128xf32>
    %75 = arith.addf %71, %74 : vector<8x128xf32>
    %c0_66 = arith.constant 0 : index
    %c0_67 = arith.constant 0 : index
    %76 = vector.load %arg6[%c0_66, %c0_67] : memref<128x128xf32, #tpu.memory_space<vmem>>, vector<128x128xf32>
    %cst_68 = arith.constant dense<0.000000e+00> : vector<8x128xf32>
    %77 = tpu.matmul %75, %76, %cst_68 {dimension_numbers = #tpu.dot_dimension_numbers<[1], [0], [0], [1], [0, 0, 1, 1], [], []>} : vector<8x128xf32>, vector<128x128xf32>, vector<8x128xf32> -> vector<8x128xf32>
    %c0_69 = arith.constant 0 : index
    %c0_70 = arith.constant 0 : index
    %78 = vector.load %arg7[%c0_69, %c0_70] : memref<1x128xf32, #tpu.memory_space<vmem>>, vector<1x128xf32>
    %79 = vector.broadcast %78 : vector<1x128xf32> to vector<8x128xf32>
    %80 = arith.addf %77, %79 : vector<8x128xf32>
    %c0_71 = arith.constant 0 : index
    %c0_72 = arith.constant 0 : index
    %81 = vector.load %arg8[%c0_71, %c0_72] : memref<8x128xf32, #tpu.memory_space<vmem>>, vector<8x128xf32>
    tpu.vector_store %arg8[%c0_71, %c0_72], %80 {strides = array<i32>} : memref<8x128xf32, #tpu.memory_space<vmem>>, vector<8x128xf32>,
    return
  }
  func.func @transform_0(%arg0: i32) -> (i32, i32) {
    %c0_i32 = arith.constant 0 : i32
    %c0_i32_0 = arith.constant 0 : i32
    return %arg0, %c0_i32 : i32, i32
  }
  func.func @transform_1(%arg0: i32) -> (i32, i32) {
    %c0_i32 = arith.constant 0 : i32
    %c0_i32_0 = arith.constant 0 : i32
    %c0_i32_1 = arith.constant 0 : i32
    return %c0_i32, %c0_i32_0 : i32, i32
  }
  func.func @transform_2(%arg0: i32) -> (i32, i32) {
    %c0_i32 = arith.constant 0 : i32
    %c0_i32_0 = arith.constant 0 : i32
    %c0_i32_1 = arith.constant 0 : i32
    return %c0_i32, %c0_i32_0 : i32, i32
  }
  func.func @transform_3(%arg0: i32) -> (i32, i32, i32) {
    %c0_i32 = arith.constant 0 : i32
    %c0_i32_0 = arith.constant 0 : i32
    %c0_i32_1 = arith.constant 0 : i32
    %c0_i32_2 = arith.constant 0 : i32
    return %c0_i32, %c0_i32_0, %c0_i32_1 : i32, i32, i32
  }
  func.func @transform_4(%arg0: i32) -> (i32, i32, i32) {
    %c0_i32 = arith.constant 0 : i32
    %c0_i32_0 = arith.constant 0 : i32
    %c0_i32_1 = arith.constant 0 : i32
    %c0_i32_2 = arith.constant 0 : i32
    return %c0_i32, %c0_i32_0, %c0_i32_1 : i32, i32, i32
  }
  func.func @transform_5(%arg0: i32) -> (i32, i32) {
    %c0_i32 = arith.constant 0 : i32
    %c0_i32_0 = arith.constant 0 : i32
    %c0_i32_1 = arith.constant 0 : i32
    return %c0_i32, %c0_i32_0 : i32, i32
  }
  func.func @transform_6(%arg0: i32) -> (i32, i32) {
    %c0_i32 = arith.constant 0 : i32
    %c0_i32_0 = arith.constant 0 : i32
    %c0_i32_1 = arith.constant 0 : i32
    return %c0_i32, %c0_i32_0 : i32, i32
  }
  func.func @transform_7(%arg0: i32) -> (i32, i32) {
    %c0_i32 = arith.constant 0 : i32
    %c0_i32_0 = arith.constant 0 : i32
    return %arg0, %c0_i32 : i32, i32
  }
}

</mosaic_0001>

<llo_original>
// kernel: deep_regression.1
$region0: #{deep_regression.1}
  #allocation0 [shape = 'u32[]', space=smem, size = 0x4, offset = 0x4, fixed_abs, tag = 'smem constant byte address 0x4 - core index']
  #allocation1 [shape = 'u32[144,128]{1,0:T(1,128)}', space=vmem, size = 0x12000, scoped, tag = 'internal scratch']
  %s0 = inlined_call_operand.vmem [shape: f32[8,128], index: 0, kind: input, shape index: {}]
  %s1 = inlined_call_operand.vmem [shape: f32[128,128], index: 1, kind: input, shape index: {}]
  %s2 = inlined_call_operand.vmem [shape: f32[1,128], index: 2, kind: input, shape index: {}]
  %s3 = inlined_call_operand.vmem [shape: f32[10,128,128], index: 3, kind: input, shape index: {}]
  %s4 = inlined_call_operand.vmem [shape: f32[10,1,128], index: 4, kind: input, shape index: {}]
  %s5 = inlined_call_operand.vmem [shape: f32[128,128], index: 5, kind: input, shape index: {}]
  %s6 = inlined_call_operand.vmem [shape: f32[1,128], index: 6, kind: input, shape index: {}]
  %s7 = inlined_call_operand.vmem [shape: f32[8,128], index: 7, kind: output, shape index: {}]
  %s8 = sld [smem:[#allocation0]]
  $region38: #{deep_regression.1} parent=0
    _
  %s10 = ssub.s32 1, %s8
  %s11 = scalar_select 0, %s10, %s8
  // Predicated region
  $region2: #{deep_regression.1} parent=0 // pred_check
    _
  $region3: #{deep_regression.1} parent=0 // pred_check_branch
    %13 = sbr.rel (0) target = $region5
  $region4: #{deep_regression.1} parent=0 // pred_region
    _
  $region5: #{deep_regression.1} parent=0 // pred_fallthru
    _
  // Predicated region
  $region6: #{deep_regression.1} parent=0 // pred_check
    _
  $region7: #{deep_regression.1} parent=0 // pred_check_branch
    %15 = sbr.rel (0) target = $region9
  $region8: #{deep_regression.1} parent=0 // pred_region
    _
  $region9: #{deep_regression.1} parent=0 // pred_fallthru
    _
  // Predicated region
  $region10: #{deep_regression.1} parent=0 // pred_check
    _
  $region11: #{deep_regression.1} parent=0 // pred_check_branch
    %17 = sbr.rel (0) target = $region13
  $region12: #{deep_regression.1} parent=0 // pred_region
    _
  $region13: #{deep_regression.1} parent=0 // pred_fallthru
    _
  // Predicated region
  $region14: #{deep_regression.1} parent=0 // pred_check
    _
  $region15: #{deep_regression.1} parent=0 // pred_check_branch
    %19 = sbr.rel (0) target = $region17
  $region16: #{deep_regression.1} parent=0 // pred_region
    _
  $region17: #{deep_regression.1} parent=0 // pred_fallthru
    _
  // Predicated region
  $region18: #{deep_regression.1} parent=0 // pred_check
    _
  $region19: #{deep_regression.1} parent=0 // pred_check_branch
    %21 = sbr.rel (0) target = $region21
  $region20: #{deep_regression.1} parent=0 // pred_region
    _
  $region21: #{deep_regression.1} parent=0 // pred_fallthru
    _
  // Predicated region
  $region22: #{deep_regression.1} parent=0 // pred_check
    _
  $region23: #{deep_regression.1} parent=0 // pred_check_branch
    %23 = sbr.rel (0) target = $region25
  $region24: #{deep_regression.1} parent=0 // pred_region
    _
  $region25: #{deep_regression.1} parent=0 // pred_fallthru
    _
  // Predicated region
  $region26: #{deep_regression.1} parent=0 // pred_check
    _
  $region27: #{deep_regression.1} parent=0 // pred_check_branch
    %25 = sbr.rel (0) target = $region29
  $region28: #{deep_regression.1} parent=0 // pred_region
    _
  $region29: #{deep_regression.1} parent=0 // pred_fallthru
    _
  %v26 = vld [vmem:[%s0] sm:$0xff]
  %v27 = vld [vmem:[%s1] sm:$0xff]
  %v28 = vld [vmem:[%s1 + $0x8] sm:$0xff]
  %v29 = vld [vmem:[%s1 + $0x10] sm:$0xff]
  %v30 = vld [vmem:[%s1 + $0x18] sm:$0xff]
  %v31 = vld [vmem:[%s1 + $0x20] sm:$0xff]
  %v32 = vld [vmem:[%s1 + $0x28] sm:$0xff]
  %v33 = vld [vmem:[%s1 + $0x30] sm:$0xff]
  %v34 = vld [vmem:[%s1 + $0x38] sm:$0xff]
  %v35 = vld [vmem:[%s1 + $0x40] sm:$0xff]
  %v36 = vld [vmem:[%s1 + $0x48] sm:$0xff]
  %v37 = vld [vmem:[%s1 + $0x50] sm:$0xff]
  %v38 = vld [vmem:[%s1 + $0x58] sm:$0xff]
  %v39 = vld [vmem:[%s1 + $0x60] sm:$0xff]
  %v40 = vld [vmem:[%s1 + $0x68] sm:$0xff]
  %v41 = vld [vmem:[%s1 + $0x70] sm:$0xff]
  %v42 = vld [vmem:[%s1 + $0x78] sm:$0xff]
  %v43 = vld [vmem:[%s2] sm:$0x1]
  %v45 = vlaneseq
  %v46 = vshrl.u32 %v45, 7
  %v47 = vsub.s32 0, %v46
  %v48 = vrot.slane %v43, %v47
  %50 = vmatprep.subr.mxu0 0.0
  %51 = vmatpush1.msra.mxu0 %v27
  %52 = vmatprep.subr.mxu0 0.0
  %53 = vmatpush1.msra.mxu0 %v28
  %54 = vmatprep.subr.mxu0 0.0
  %55 = vmatpush1.msra.mxu0 %v29
  %56 = vmatprep.subr.mxu0 0.0
  %57 = vmatpush1.msra.mxu0 %v30
  %58 = vmatprep.subr.mxu0 0.0
  %59 = vmatpush1.msra.mxu0 %v31
  %60 = vmatprep.subr.mxu0 0.0
  %61 = vmatpush1.msra.mxu0 %v32
  %62 = vmatprep.subr.mxu0 0.0
  %63 = vmatpush1.msra.mxu0 %v33
  %64 = vmatprep.subr.mxu0 0.0
  %65 = vmatpush1.msra.mxu0 %v34
  %66 = vmatprep.subr.mxu0 0.0
  %67 = vmatpush1.msra.mxu0 %v35
  %68 = vmatprep.subr.mxu0 0.0
  %69 = vmatpush1.msra.mxu0 %v36
  %70 = vmatprep.subr.mxu0 0.0
  %71 = vmatpush1.msra.mxu0 %v37
  %72 = vmatprep.subr.mxu0 0.0
  %73 = vmatpush1.msra.mxu0 %v38
  %74 = vmatprep.subr.mxu0 0.0
  %75 = vmatpush1.msra.mxu0 %v39
  %76 = vmatprep.subr.mxu0 0.0
  %77 = vmatpush1.msra.mxu0 %v40
  %78 = vmatprep.subr.mxu0 0.0
  %79 = vmatpush1.msra.mxu0 %v41
  %80 = vmatprep.subr.mxu0 0.0
  %81 = vmatpush1.msra.mxu0 %v42
  %82 = vmatprep.subr.mxu0 0.0
  %83 = vmatpush1.msra.mxu0 0.0
  %84 = vmatprep.subr.mxu0 0.0
  %85 = vmatpush1.msra.mxu0 0.0
  %86 = vmatprep.subr.mxu0 0.0
  %87 = vmatpush1.msra.mxu0 0.0
  %88 = vmatprep.subr.mxu0 0.0
  %89 = vmatpush1.msra.mxu0 0.0
  %90 = vmatprep.subr.mxu0 0.0
  %91 = vmatpush1.msra.mxu0 0.0
  %92 = vmatprep.subr.mxu0 0.0
  %93 = vmatpush1.msra.mxu0 0.0
  %94 = vmatprep.subr.mxu0 0.0
  %95 = vmatpush1.msra.mxu0 0.0
  %96 = vmatprep.subr.mxu0 0.0
  %97 = vmatpush1.msra.mxu0 0.0
  %98 = vmatprep.subr.mxu0 0.0
  %99 = vmatpush1.msra.mxu0 0.0
  %100 = vmatprep.subr.mxu0 0.0
  %101 = vmatpush1.msra.mxu0 0.0
  %102 = vmatprep.subr.mxu0 0.0
  %103 = vmatpush1.msra.mxu0 0.0
  %104 = vmatprep.subr.mxu0 0.0
  %105 = vmatpush1.msra.mxu0 0.0
  %106 = vmatprep.subr.mxu0 0.0
  %107 = vmatpush1.msra.mxu0 0.0
  %108 = vmatprep.subr.mxu0 0.0
  %109 = vmatpush1.msra.mxu0 0.0
  %110 = vmatprep.subr.mxu0 0.0
  %111 = vmatpush1.msra.mxu0 0.0
  %112 = vmatprep.subr.mxu0 0.0
  %113 = vmatpush1.msra.mxu0 0.0
  %114 = vmatprep.mubr.f32.mxu0 0.0
  %115 = vmatmul.mubr.f32.gmra.mrb[0].mxu0 %v26
  %v116 = vpop.f32.mrb[0].mxu0
  %v117 = vadd.f32 %v48, %v116
  %v118 = vpop.f32.mrb[0].mxu0
  %119 = vdwg.mxu0
  %v120 = vld [vmem:[%s3] sm:$0xff]
  %v121 = vld [vmem:[%s3 + $0x8] sm:$0xff]
  %v122 = vld [vmem:[%s3 + $0x10] sm:$0xff]
  %v123 = vld [vmem:[%s3 + $0x18] sm:$0xff]
  %v124 = vld [vmem:[%s3 + $0x20] sm:$0xff]
  %v125 = vld [vmem:[%s3 + $0x28] sm:$0xff]
  %v126 = vld [vmem:[%s3 + $0x30] sm:$0xff]
  %v127 = vld [vmem:[%s3 + $0x38] sm:$0xff]
  %v128 = vld [vmem:[%s3 + $0x40] sm:$0xff]
  %v129 = vld [vmem:[%s3 + $0x48] sm:$0xff]
  %v130 = vld [vmem:[%s3 + $0x50] sm:$0xff]
  %v131 = vld [vmem:[%s3 + $0x58] sm:$0xff]
  %v132 = vld [vmem:[%s3 + $0x60] sm:$0xff]
  %v133 = vld [vmem:[%s3 + $0x68] sm:$0xff]
  %v134 = vld [vmem:[%s3 + $0x70] sm:$0xff]
  %v135 = vld [vmem:[%s3 + $0x78] sm:$0xff]
  %v136 = vld [vmem:[%s4] sm:$0x1]
  %v138 = vlaneseq
  %v139 = vshrl.u32 %v138, 7
  %v140 = vsub.s32 0, %v139
  %v141 = vrot.slane %v136, %v140
  %143 = vmatprep.subr.mxu0 0.0
  %144 = vmatpush1.msra.mxu0 %v120
  %145 = vmatprep.subr.mxu0 0.0
  %146 = vmatpush1.msra.mxu0 %v121
  %147 = vmatprep.subr.mxu0 0.0
  %148 = vmatpush1.msra.mxu0 %v122
  %149 = vmatprep.subr.mxu0 0.0
  %150 = vmatpush1.msra.mxu0 %v123
  %151 = vmatprep.subr.mxu0 0.0
  %152 = vmatpush1.msra.mxu0 %v124
  %153 = vmatprep.subr.mxu0 0.0
  %154 = vmatpush1.msra.mxu0 %v125
  %155 = vmatprep.subr.mxu0 0.0
  %156 = vmatpush1.msra.mxu0 %v126
  %157 = vmatprep.subr.mxu0 0.0
  %158 = vmatpush1.msra.mxu0 %v127
  %159 = vmatprep.subr.mxu0 0.0
  %160 = vmatpush1.msra.mxu0 %v128
  %161 = vmatprep.subr.mxu0 0.0
  %162 = vmatpush1.msra.mxu0 %v129
  %163 = vmatprep.subr.mxu0 0.0
  %164 = vmatpush1.msra.mxu0 %v130
  %165 = vmatprep.subr.mxu0 0.0
  %166 = vmatpush1.msra.mxu0 %v131
  %167 = vmatprep.subr.mxu0 0.0
  %168 = vmatpush1.msra.mxu0 %v132
  %169 = vmatprep.subr.mxu0 0.0
  %170 = vmatpush1.msra.mxu0 %v133
  %171 = vmatprep.subr.mxu0 0.0
  %172 = vmatpush1.msra.mxu0 %v134
  %173 = vmatprep.subr.mxu0 0.0
  %174 = vmatpush1.msra.mxu0 %v135
  %175 = vmatprep.subr.mxu0 0.0
  %176 = vmatpush1.msra.mxu0 0.0
  %177 = vmatprep.subr.mxu0 0.0
  %178 = vmatpush1.msra.mxu0 0.0
  %179 = vmatprep.subr.mxu0 0.0
  %180 = vmatpush1.msra.mxu0 0.0
  %181 = vmatprep.subr.mxu0 0.0
  %182 = vmatpush1.msra.mxu0 0.0
  %183 = vmatprep.subr.mxu0 0.0
  %184 = vmatpush1.msra.mxu0 0.0
  %185 = vmatprep.subr.mxu0 0.0
  %186 = vmatpush1.msra.mxu0 0.0
  %187 = vmatprep.subr.mxu0 0.0
  %188 = vmatpush1.msra.mxu0 0.0
  %189 = vmatprep.subr.mxu0 0.0
  %190 = vmatpush1.msra.mxu0 0.0
  %191 = vmatprep.subr.mxu0 0.0
  %192 = vmatpush1.msra.mxu0 0.0
  %193 = vmatprep.subr.mxu0 0.0
  %194 = vmatpush1.msra.mxu0 0.0
  %195 = vmatprep.subr.mxu0 0.0
  %196 = vmatpush1.msra.mxu0 0.0
  %197 = vmatprep.subr.mxu0 0.0
  %198 = vmatpush1.msra.mxu0 0.0
  %199 = vmatprep.subr.mxu0 0.0
  %200 = vmatpush1.msra.mxu0 0.0
  %201 = vmatprep.subr.mxu0 0.0
  %202 = vmatpush1.msra.mxu0 0.0
  %203 = vmatprep.subr.mxu0 0.0
  %204 = vmatpush1.msra.mxu0 0.0
  %205 = vmatprep.subr.mxu0 0.0
  %206 = vmatpush1.msra.mxu0 0.0
  %207 = vmatprep.mubr.f32.mxu0 0.0
  %208 = vmatmul.mubr.f32.gmra.mrb[0].mxu0 %v117
  %v209 = vpop.f32.mrb[0].mxu0
  %v210 = vadd.f32 %v141, %v209
  %v211 = vpop.f32.mrb[0].mxu0
  %212 = vdwg.mxu0
  %s213 = scalar_lea.vmem %s3, 128
  %v214 = vld [vmem:[%s213] sm:$0xff]
  %v215 = vld [vmem:[%s213 + $0x8] sm:$0xff]
  %v216 = vld [vmem:[%s213 + $0x10] sm:$0xff]
  %v217 = vld [vmem:[%s213 + $0x18] sm:$0xff]
  %v218 = vld [vmem:[%s213 + $0x20] sm:$0xff]
  %v219 = vld [vmem:[%s213 + $0x28] sm:$0xff]
  %v220 = vld [vmem:[%s213 + $0x30] sm:$0xff]
  %v221 = vld [vmem:[%s213 + $0x38] sm:$0xff]
  %v222 = vld [vmem:[%s213 + $0x40] sm:$0xff]
  %v223 = vld [vmem:[%s213 + $0x48] sm:$0xff]
  %v224 = vld [vmem:[%s213 + $0x50] sm:$0xff]
  %v225 = vld [vmem:[%s213 + $0x58] sm:$0xff]
  %v226 = vld [vmem:[%s213 + $0x60] sm:$0xff]
  %v227 = vld [vmem:[%s213 + $0x68] sm:$0xff]
  %v228 = vld [vmem:[%s213 + $0x70] sm:$0xff]
  %v229 = vld [vmem:[%s213 + $0x78] sm:$0xff]
  %s230 = scalar_lea.vmem %s4, 1
  %v231 = vld [vmem:[%s230] sm:$0x1]
  %v233 = vlaneseq
  %v234 = vshrl.u32 %v233, 7
  %v235 = vsub.s32 0, %v234
  %v236 = vrot.slane %v231, %v235
  %238 = vmatprep.subr.mxu0 0.0
  %239 = vmatpush1.msra.mxu0 %v214
  %240 = vmatprep.subr.mxu0 0.0
  %241 = vmatpush1.msra.mxu0 %v215
  %242 = vmatprep.subr.mxu0 0.0
  %243 = vmatpush1.msra.mxu0 %v216
  %244 = vmatprep.subr.mxu0 0.0
  %245 = vmatpush1.msra.mxu0 %v217
  %246 = vmatprep.subr.mxu0 0.0
  %247 = vmatpush1.msra.mxu0 %v218
  %248 = vmatprep.subr.mxu0 0.0
  %249 = vmatpush1.msra.mxu0 %v219
  %250 = vmatprep.subr.mxu0 0.0
  %251 = vmatpush1.msra.mxu0 %v220
  %252 = vmatprep.subr.mxu0 0.0
  %253 = vmatpush1.msra.mxu0 %v221
  %254 = vmatprep.subr.mxu0 0.0
  %255 = vmatpush1.msra.mxu0 %v222
  %256 = vmatprep.subr.mxu0 0.0
  %257 = vmatpush1.msra.mxu0 %v223
  %258 = vmatprep.subr.mxu0 0.0
  %259 = vmatpush1.msra.mxu0 %v224
  %260 = vmatprep.subr.mxu0 0.0
  %261 = vmatpush1.msra.mxu0 %v225
  %262 = vmatprep.subr.mxu0 0.0
  %263 = vmatpush1.msra.mxu0 %v226
  %264 = vmatprep.subr.mxu0 0.0
  %265 = vmatpush1.msra.mxu0 %v227
  %266 = vmatprep.subr.mxu0 0.0
  %267 = vmatpush1.msra.mxu0 %v228
  %268 = vmatprep.subr.mxu0 0.0
  %269 = vmatpush1.msra.mxu0 %v229
  %270 = vmatprep.subr.mxu0 0.0
  %271 = vmatpush1.msra.mxu0 0.0
  %272 = vmatprep.subr.mxu0 0.0
  %273 = vmatpush1.msra.mxu0 0.0
  %274 = vmatprep.subr.mxu0 0.0
  %275 = vmatpush1.msra.mxu0 0.0
  %276 = vmatprep.subr.mxu0 0.0
  %277 = vmatpush1.msra.mxu0 0.0
  %278 = vmatprep.subr.mxu0 0.0
  %279 = vmatpush1.msra.mxu0 0.0
  %280 = vmatprep.subr.mxu0 0.0
  %281 = vmatpush1.msra.mxu0 0.0
  %282 = vmatprep.subr.mxu0 0.0
  %283 = vmatpush1.msra.mxu0 0.0
  %284 = vmatprep.subr.mxu0 0.0
  %285 = vmatpush1.msra.mxu0 0.0
  %286 = vmatprep.subr.mxu0 0.0
  %287 = vmatpush1.msra.mxu0 0.0
  %288 = vmatprep.subr.mxu0 0.0
  %289 = vmatpush1.msra.mxu0 0.0
  %290 = vmatprep.subr.mxu0 0.0
  %291 = vmatpush1.msra.mxu0 0.0
  %292 = vmatprep.subr.mxu0 0.0
  %293 = vmatpush1.msra.mxu0 0.0
  %294 = vmatprep.subr.mxu0 0.0
  %295 = vmatpush1.msra.mxu0 0.0
  %296 = vmatprep.subr.mxu0 0.0
  %297 = vmatpush1.msra.mxu0 0.0
  %298 = vmatprep.subr.mxu0 0.0
  %299 = vmatpush1.msra.mxu0 0.0
  %300 = vmatprep.subr.mxu0 0.0
  %301 = vmatpush1.msra.mxu0 0.0
  %302 = vmatprep.mubr.f32.mxu0 0.0
  %303 = vmatmul.mubr.f32.gmra.mrb[0].mxu0 %v210
  %v304 = vpop.f32.mrb[0].mxu0
  %v305 = vadd.f32 %v236, %v304
  %v306 = vpop.f32.mrb[0].mxu0
  %307 = vdwg.mxu0
  %s308 = scalar_lea.vmem %s3, 256
  %v309 = vld [vmem:[%s308] sm:$0xff]
  %v310 = vld [vmem:[%s308 + $0x8] sm:$0xff]
  %v311 = vld [vmem:[%s308 + $0x10] sm:$0xff]
  %v312 = vld [vmem:[%s308 + $0x18] sm:$0xff]
  %v313 = vld [vmem:[%s308 + $0x20] sm:$0xff]
  %v314 = vld [vmem:[%s308 + $0x28] sm:$0xff]
  %v315 = vld [vmem:[%s308 + $0x30] sm:$0xff]
  %v316 = vld [vmem:[%s308 + $0x38] sm:$0xff]
  %v317 = vld [vmem:[%s308 + $0x40] sm:$0xff]
  %v318 = vld [vmem:[%s308 + $0x48] sm:$0xff]
  %v319 = vld [vmem:[%s308 + $0x50] sm:$0xff]
  %v320 = vld [vmem:[%s308 + $0x58] sm:$0xff]
  %v321 = vld [vmem:[%s308 + $0x60] sm:$0xff]
  %v322 = vld [vmem:[%s308 + $0x68] sm:$0xff]
  %v323 = vld [vmem:[%s308 + $0x70] sm:$0xff]
  %v324 = vld [vmem:[%s308 + $0x78] sm:$0xff]
  %s325 = scalar_lea.vmem %s4, 2
  %v326 = vld [vmem:[%s325] sm:$0x1]
  %v328 = vlaneseq
  %v329 = vshrl.u32 %v328, 7
  %v330 = vsub.s32 0, %v329
  %v331 = vrot.slane %v326, %v330
  %333 = vmatprep.subr.mxu0 0.0
  %334 = vmatpush1.msra.mxu0 %v309
  %335 = vmatprep.subr.mxu0 0.0
  %336 = vmatpush1.msra.mxu0 %v310
  %337 = vmatprep.subr.mxu0 0.0
  %338 = vmatpush1.msra.mxu0 %v311
  %339 = vmatprep.subr.mxu0 0.0
  %340 = vmatpush1.msra.mxu0 %v312
  %341 = vmatprep.subr.mxu0 0.0
  %342 = vmatpush1.msra.mxu0 %v313
  %343 = vmatprep.subr.mxu0 0.0
  %344 = vmatpush1.msra.mxu0 %v314
  %345 = vmatprep.subr.mxu0 0.0
  %346 = vmatpush1.msra.mxu0 %v315
  %347 = vmatprep.subr.mxu0 0.0
  %348 = vmatpush1.msra.mxu0 %v316
  %349 = vmatprep.subr.mxu0 0.0
  %350 = vmatpush1.msra.mxu0 %v317
  %351 = vmatprep.subr.mxu0 0.0
  %352 = vmatpush1.msra.mxu0 %v318
  %353 = vmatprep.subr.mxu0 0.0
  %354 = vmatpush1.msra.mxu0 %v319
  %355 = vmatprep.subr.mxu0 0.0
  %356 = vmatpush1.msra.mxu0 %v320
  %357 = vmatprep.subr.mxu0 0.0
  %358 = vmatpush1.msra.mxu0 %v321
  %359 = vmatprep.subr.mxu0 0.0
  %360 = vmatpush1.msra.mxu0 %v322
  %361 = vmatprep.subr.mxu0 0.0
  %362 = vmatpush1.msra.mxu0 %v323
  %363 = vmatprep.subr.mxu0 0.0
  %364 = vmatpush1.msra.mxu0 %v324
  %365 = vmatprep.subr.mxu0 0.0
  %366 = vmatpush1.msra.mxu0 0.0
  %367 = vmatprep.subr.mxu0 0.0
  %368 = vmatpush1.msra.mxu0 0.0
  %369 = vmatprep.subr.mxu0 0.0
  %370 = vmatpush1.msra.mxu0 0.0
  %371 = vmatprep.subr.mxu0 0.0
  %372 = vmatpush1.msra.mxu0 0.0
  %373 = vmatprep.subr.mxu0 0.0
  %374 = vmatpush1.msra.mxu0 0.0
  %375 = vmatprep.subr.mxu0 0.0
  %376 = vmatpush1.msra.mxu0 0.0
  %377 = vmatprep.subr.mxu0 0.0
  %378 = vmatpush1.msra.mxu0 0.0
  %379 = vmatprep.subr.mxu0 0.0
  %380 = vmatpush1.msra.mxu0 0.0
  %381 = vmatprep.subr.mxu0 0.0
  %382 = vmatpush1.msra.mxu0 0.0
  %383 = vmatprep.subr.mxu0 0.0
  %384 = vmatpush1.msra.mxu0 0.0
  %385 = vmatprep.subr.mxu0 0.0
  %386 = vmatpush1.msra.mxu0 0.0
  %387 = vmatprep.subr.mxu0 0.0
  %388 = vmatpush1.msra.mxu0 0.0
  %389 = vmatprep.subr.mxu0 0.0
  %390 = vmatpush1.msra.mxu0 0.0
  %391 = vmatprep.subr.mxu0 0.0
  %392 = vmatpush1.msra.mxu0 0.0
  %393 = vmatprep.subr.mxu0 0.0
  %394 = vmatpush1.msra.mxu0 0.0
  %395 = vmatprep.subr.mxu0 0.0
  %396 = vmatpush1.msra.mxu0 0.0
  %397 = vmatprep.mubr.f32.mxu0 0.0
  %398 = vmatmul.mubr.f32.gmra.mrb[0].mxu0 %v305
  %v399 = vpop.f32.mrb[0].mxu0
  %v400 = vadd.f32 %v331, %v399
  %v401 = vpop.f32.mrb[0].mxu0
  %402 = vdwg.mxu0
  %s403 = scalar_lea.vmem %s3, 384
  %v404 = vld [vmem:[%s403] sm:$0xff]
  %v405 = vld [vmem:[%s403 + $0x8] sm:$0xff]
  %v406 = vld [vmem:[%s403 + $0x10] sm:$0xff]
  %v407 = vld [vmem:[%s403 + $0x18] sm:$0xff]
  %v408 = vld [vmem:[%s403 + $0x20] sm:$0xff]
  %v409 = vld [vmem:[%s403 + $0x28] sm:$0xff]
  %v410 = vld [vmem:[%s403 + $0x30] sm:$0xff]
  %v411 = vld [vmem:[%s403 + $0x38] sm:$0xff]
  %v412 = vld [vmem:[%s403 + $0x40] sm:$0xff]
  %v413 = vld [vmem:[%s403 + $0x48] sm:$0xff]
  %v414 = vld [vmem:[%s403 + $0x50] sm:$0xff]
  %v415 = vld [vmem:[%s403 + $0x58] sm:$0xff]
  %v416 = vld [vmem:[%s403 + $0x60] sm:$0xff]
  %v417 = vld [vmem:[%s403 + $0x68] sm:$0xff]
  %v418 = vld [vmem:[%s403 + $0x70] sm:$0xff]
  %v419 = vld [vmem:[%s403 + $0x78] sm:$0xff]
  %s420 = scalar_lea.vmem %s4, 3
  %v421 = vld [vmem:[%s420] sm:$0x1]
  %v423 = vlaneseq
  %v424 = vshrl.u32 %v423, 7
  %v425 = vsub.s32 0, %v424
  %v426 = vrot.slane %v421, %v425
  %428 = vmatprep.subr.mxu0 0.0
  %429 = vmatpush1.msra.mxu0 %v404
  %430 = vmatprep.subr.mxu0 0.0
  %431 = vmatpush1.msra.mxu0 %v405
  %432 = vmatprep.subr.mxu0 0.0
  %433 = vmatpush1.msra.mxu0 %v406
  %434 = vmatprep.subr.mxu0 0.0
  %435 = vmatpush1.msra.mxu0 %v407
  %436 = vmatprep.subr.mxu0 0.0
  %437 = vmatpush1.msra.mxu0 %v408
  %438 = vmatprep.subr.mxu0 0.0
  %439 = vmatpush1.msra.mxu0 %v409
  %440 = vmatprep.subr.mxu0 0.0
  %441 = vmatpush1.msra.mxu0 %v410
  %442 = vmatprep.subr.mxu0 0.0
  %443 = vmatpush1.msra.mxu0 %v411
  %444 = vmatprep.subr.mxu0 0.0
  %445 = vmatpush1.msra.mxu0 %v412
  %446 = vmatprep.subr.mxu0 0.0
  %447 = vmatpush1.msra.mxu0 %v413
  %448 = vmatprep.subr.mxu0 0.0
  %449 = vmatpush1.msra.mxu0 %v414
  %450 = vmatprep.subr.mxu0 0.0
  %451 = vmatpush1.msra.mxu0 %v415
  %452 = vmatprep.subr.mxu0 0.0
  %453 = vmatpush1.msra.mxu0 %v416
  %454 = vmatprep.subr.mxu0 0.0
  %455 = vmatpush1.msra.mxu0 %v417
  %456 = vmatprep.subr.mxu0 0.0
  %457 = vmatpush1.msra.mxu0 %v418
  %458 = vmatprep.subr.mxu0 0.0
  %459 = vmatpush1.msra.mxu0 %v419
  %460 = vmatprep.subr.mxu0 0.0
  %461 = vmatpush1.msra.mxu0 0.0
  %462 = vmatprep.subr.mxu0 0.0
  %463 = vmatpush1.msra.mxu0 0.0
  %464 = vmatprep.subr.mxu0 0.0
  %465 = vmatpush1.msra.mxu0 0.0
  %466 = vmatprep.subr.mxu0 0.0
  %467 = vmatpush1.msra.mxu0 0.0
  %468 = vmatprep.subr.mxu0 0.0
  %469 = vmatpush1.msra.mxu0 0.0
  %470 = vmatprep.subr.mxu0 0.0
  %471 = vmatpush1.msra.mxu0 0.0
  %472 = vmatprep.subr.mxu0 0.0
  %473 = vmatpush1.msra.mxu0 0.0
  %474 = vmatprep.subr.mxu0 0.0
  %475 = vmatpush1.msra.mxu0 0.0
  %476 = vmatprep.subr.mxu0 0.0
  %477 = vmatpush1.msra.mxu0 0.0
  %478 = vmatprep.subr.mxu0 0.0
  %479 = vmatpush1.msra.mxu0 0.0
  %480 = vmatprep.subr.mxu0 0.0
  %481 = vmatpush1.msra.mxu0 0.0
  %482 = vmatprep.subr.mxu0 0.0
  %483 = vmatpush1.msra.mxu0 0.0
  %484 = vmatprep.subr.mxu0 0.0
  %485 = vmatpush1.msra.mxu0 0.0
  %486 = vmatprep.subr.mxu0 0.0
  %487 = vmatpush1.msra.mxu0 0.0
  %488 = vmatprep.subr.mxu0 0.0
  %489 = vmatpush1.msra.mxu0 0.0
  %490 = vmatprep.subr.mxu0 0.0
  %491 = vmatpush1.msra.mxu0 0.0
  %492 = vmatprep.mubr.f32.mxu0 0.0
  %493 = vmatmul.mubr.f32.gmra.mrb[0].mxu0 %v400
  %v494 = vpop.f32.mrb[0].mxu0
  %v495 = vadd.f32 %v426, %v494
  %v496 = vpop.f32.mrb[0].mxu0
  %497 = vdwg.mxu0
  %s498 = scalar_lea.vmem %s3, 512
  %v499 = vld [vmem:[%s498] sm:$0xff]
  %v500 = vld [vmem:[%s498 + $0x8] sm:$0xff]
  %v501 = vld [vmem:[%s498 + $0x10] sm:$0xff]
  %v502 = vld [vmem:[%s498 + $0x18] sm:$0xff]
  %v503 = vld [vmem:[%s498 + $0x20] sm:$0xff]
  %v504 = vld [vmem:[%s498 + $0x28] sm:$0xff]
  %v505 = vld [vmem:[%s498 + $0x30] sm:$0xff]
  %v506 = vld [vmem:[%s498 + $0x38] sm:$0xff]
  %v507 = vld [vmem:[%s498 + $0x40] sm:$0xff]
  %v508 = vld [vmem:[%s498 + $0x48] sm:$0xff]
  %v509 = vld [vmem:[%s498 + $0x50] sm:$0xff]
  %v510 = vld [vmem:[%s498 + $0x58] sm:$0xff]
  %v511 = vld [vmem:[%s498 + $0x60] sm:$0xff]
  %v512 = vld [vmem:[%s498 + $0x68] sm:$0xff]
  %v513 = vld [vmem:[%s498 + $0x70] sm:$0xff]
  %v514 = vld [vmem:[%s498 + $0x78] sm:$0xff]
  %s515 = scalar_lea.vmem %s4, 4
  %v516 = vld [vmem:[%s515] sm:$0x1]
  %v518 = vlaneseq
  %v519 = vshrl.u32 %v518, 7
  %v520 = vsub.s32 0, %v519
  %v521 = vrot.slane %v516, %v520
  %523 = vmatprep.subr.mxu0 0.0
  %524 = vmatpush1.msra.mxu0 %v499
  %525 = vmatprep.subr.mxu0 0.0
  %526 = vmatpush1.msra.mxu0 %v500
  %527 = vmatprep.subr.mxu0 0.0
  %528 = vmatpush1.msra.mxu0 %v501
  %529 = vmatprep.subr.mxu0 0.0
  %530 = vmatpush1.msra.mxu0 %v502
  %531 = vmatprep.subr.mxu0 0.0
  %532 = vmatpush1.msra.mxu0 %v503
  %533 = vmatprep.subr.mxu0 0.0
  %534 = vmatpush1.msra.mxu0 %v504
  %535 = vmatprep.subr.mxu0 0.0
  %536 = vmatpush1.msra.mxu0 %v505
  %537 = vmatprep.subr.mxu0 0.0
  %538 = vmatpush1.msra.mxu0 %v506
  %539 = vmatprep.subr.mxu0 0.0
  %540 = vmatpush1.msra.mxu0 %v507
  %541 = vmatprep.subr.mxu0 0.0
  %542 = vmatpush1.msra.mxu0 %v508
  %543 = vmatprep.subr.mxu0 0.0
  %544 = vmatpush1.msra.mxu0 %v509
  %545 = vmatprep.subr.mxu0 0.0
  %546 = vmatpush1.msra.mxu0 %v510
  %547 = vmatprep.subr.mxu0 0.0
  %548 = vmatpush1.msra.mxu0 %v511
  %549 = vmatprep.subr.mxu0 0.0
  %550 = vmatpush1.msra.mxu0 %v512
  %551 = vmatprep.subr.mxu0 0.0
  %552 = vmatpush1.msra.mxu0 %v513
  %553 = vmatprep.subr.mxu0 0.0
  %554 = vmatpush1.msra.mxu0 %v514
  %555 = vmatprep.subr.mxu0 0.0
  %556 = vmatpush1.msra.mxu0 0.0
  %557 = vmatprep.subr.mxu0 0.0
  %558 = vmatpush1.msra.mxu0 0.0
  %559 = vmatprep.subr.mxu0 0.0
  %560 = vmatpush1.msra.mxu0 0.0
  %561 = vmatprep.subr.mxu0 0.0
  %562 = vmatpush1.msra.mxu0 0.0
  %563 = vmatprep.subr.mxu0 0.0
  %564 = vmatpush1.msra.mxu0 0.0
  %565 = vmatprep.subr.mxu0 0.0
  %566 = vmatpush1.msra.mxu0 0.0
  %567 = vmatprep.subr.mxu0 0.0
  %568 = vmatpush1.msra.mxu0 0.0
  %569 = vmatprep.subr.mxu0 0.0
  %570 = vmatpush1.msra.mxu0 0.0
  %571 = vmatprep.subr.mxu0 0.0
  %572 = vmatpush1.msra.mxu0 0.0
  %573 = vmatprep.subr.mxu0 0.0
  %574 = vmatpush1.msra.mxu0 0.0
  %575 = vmatprep.subr.mxu0 0.0
  %576 = vmatpush1.msra.mxu0 0.0
  %577 = vmatprep.subr.mxu0 0.0
  %578 = vmatpush1.msra.mxu0 0.0
  %579 = vmatprep.subr.mxu0 0.0
  %580 = vmatpush1.msra.mxu0 0.0
  %581 = vmatprep.subr.mxu0 0.0
  %582 = vmatpush1.msra.mxu0 0.0
  %583 = vmatprep.subr.mxu0 0.0
  %584 = vmatpush1.msra.mxu0 0.0
  %585 = vmatprep.subr.mxu0 0.0
  %586 = vmatpush1.msra.mxu0 0.0
  %587 = vmatprep.mubr.f32.mxu0 0.0
  %588 = vmatmul.mubr.f32.gmra.mrb[0].mxu0 %v495
  %v589 = vpop.f32.mrb[0].mxu0
  %v590 = vadd.f32 %v521, %v589
  %v591 = vpop.f32.mrb[0].mxu0
  %592 = vdwg.mxu0
  %s593 = scalar_lea.vmem %s3, 640
  %v594 = vld [vmem:[%s593] sm:$0xff]
  %v595 = vld [vmem:[%s593 + $0x8] sm:$0xff]
  %v596 = vld [vmem:[%s593 + $0x10] sm:$0xff]
  %v597 = vld [vmem:[%s593 + $0x18] sm:$0xff]
  %v598 = vld [vmem:[%s593 + $0x20] sm:$0xff]
  %v599 = vld [vmem:[%s593 + $0x28] sm:$0xff]
  %v600 = vld [vmem:[%s593 + $0x30] sm:$0xff]
  %v601 = vld [vmem:[%s593 + $0x38] sm:$0xff]
  %v602 = vld [vmem:[%s593 + $0x40] sm:$0xff]
  %v603 = vld [vmem:[%s593 + $0x48] sm:$0xff]
  %v604 = vld [vmem:[%s593 + $0x50] sm:$0xff]
  %v605 = vld [vmem:[%s593 + $0x58] sm:$0xff]
  %v606 = vld [vmem:[%s593 + $0x60] sm:$0xff]
  %v607 = vld [vmem:[%s593 + $0x68] sm:$0xff]
  %v608 = vld [vmem:[%s593 + $0x70] sm:$0xff]
  %v609 = vld [vmem:[%s593 + $0x78] sm:$0xff]
  %s610 = scalar_lea.vmem %s4, 5
  %v611 = vld [vmem:[%s610] sm:$0x1]
  %v613 = vlaneseq
  %v614 = vshrl.u32 %v613, 7
  %v615 = vsub.s32 0, %v614
  %v616 = vrot.slane %v611, %v615
  %618 = vmatprep.subr.mxu0 0.0
  %619 = vmatpush1.msra.mxu0 %v594
  %620 = vmatprep.subr.mxu0 0.0
  %621 = vmatpush1.msra.mxu0 %v595
  %622 = vmatprep.subr.mxu0 0.0
  %623 = vmatpush1.msra.mxu0 %v596
  %624 = vmatprep.subr.mxu0 0.0
  %625 = vmatpush1.msra.mxu0 %v597
  %626 = vmatprep.subr.mxu0 0.0
  %627 = vmatpush1.msra.mxu0 %v598
  %628 = vmatprep.subr.mxu0 0.0
  %629 = vmatpush1.msra.mxu0 %v599
  %630 = vmatprep.subr.mxu0 0.0
  %631 = vmatpush1.msra.mxu0 %v600
  %632 = vmatprep.subr.mxu0 0.0
  %633 = vmatpush1.msra.mxu0 %v601
  %634 = vmatprep.subr.mxu0 0.0
  %635 = vmatpush1.msra.mxu0 %v602
  %636 = vmatprep.subr.mxu0 0.0
  %637 = vmatpush1.msra.mxu0 %v603
  %638 = vmatprep.subr.mxu0 0.0
  %639 = vmatpush1.msra.mxu0 %v604
  %640 = vmatprep.subr.mxu0 0.0
  %641 = vmatpush1.msra.mxu0 %v605
  %642 = vmatprep.subr.mxu0 0.0
  %643 = vmatpush1.msra.mxu0 %v606
  %644 = vmatprep.subr.mxu0 0.0
  %645 = vmatpush1.msra.mxu0 %v607
  %646 = vmatprep.subr.mxu0 0.0
  %647 = vmatpush1.msra.mxu0 %v608
  %648 = vmatprep.subr.mxu0 0.0
  %649 = vmatpush1.msra.mxu0 %v609
  %650 = vmatprep.subr.mxu0 0.0
  %651 = vmatpush1.msra.mxu0 0.0
  %652 = vmatprep.subr.mxu0 0.0
  %653 = vmatpush1.msra.mxu0 0.0
  %654 = vmatprep.subr.mxu0 0.0
  %655 = vmatpush1.msra.mxu0 0.0
  %656 = vmatprep.subr.mxu0 0.0
  %657 = vmatpush1.msra.mxu0 0.0
  %658 = vmatprep.subr.mxu0 0.0
  %659 = vmatpush1.msra.mxu0 0.0
  %660 = vmatprep.subr.mxu0 0.0
  %661 = vmatpush1.msra.mxu0 0.0
  %662 = vmatprep.subr.mxu0 0.0
  %663 = vmatpush1.msra.mxu0 0.0
  %664 = vmatprep.subr.mxu0 0.0
  %665 = vmatpush1.msra.mxu0 0.0
  %666 = vmatprep.subr.mxu0 0.0
  %667 = vmatpush1.msra.mxu0 0.0
  %668 = vmatprep.subr.mxu0 0.0
  %669 = vmatpush1.msra.mxu0 0.0
  %670 = vmatprep.subr.mxu0 0.0
  %671 = vmatpush1.msra.mxu0 0.0
  %672 = vmatprep.subr.mxu0 0.0
  %673 = vmatpush1.msra.mxu0 0.0
  %674 = vmatprep.subr.mxu0 0.0
  %675 = vmatpush1.msra.mxu0 0.0
  %676 = vmatprep.subr.mxu0 0.0
  %677 = vmatpush1.msra.mxu0 0.0
  %678 = vmatprep.subr.mxu0 0.0
  %679 = vmatpush1.msra.mxu0 0.0
  %680 = vmatprep.subr.mxu0 0.0
  %681 = vmatpush1.msra.mxu0 0.0
  %682 = vmatprep.mubr.f32.mxu0 0.0
  %683 = vmatmul.mubr.f32.gmra.mrb[0].mxu0 %v590
  %v684 = vpop.f32.mrb[0].mxu0
  %v685 = vadd.f32 %v616, %v684
  %v686 = vpop.f32.mrb[0].mxu0
  %687 = vdwg.mxu0
  %s688 = scalar_lea.vmem %s3, 768
  %v689 = vld [vmem:[%s688] sm:$0xff]
  %v690 = vld [vmem:[%s688 + $0x8] sm:$0xff]
  %v691 = vld [vmem:[%s688 + $0x10] sm:$0xff]
  %v692 = vld [vmem:[%s688 + $0x18] sm:$0xff]
  %v693 = vld [vmem:[%s688 + $0x20] sm:$0xff]
  %v694 = vld [vmem:[%s688 + $0x28] sm:$0xff]
  %v695 = vld [vmem:[%s688 + $0x30] sm:$0xff]
  %v696 = vld [vmem:[%s688 + $0x38] sm:$0xff]
  %v697 = vld [vmem:[%s688 + $0x40] sm:$0xff]
  %v698 = vld [vmem:[%s688 + $0x48] sm:$0xff]
  %v699 = vld [vmem:[%s688 + $0x50] sm:$0xff]
  %v700 = vld [vmem:[%s688 + $0x58] sm:$0xff]
  %v701 = vld [vmem:[%s688 + $0x60] sm:$0xff]
  %v702 = vld [vmem:[%s688 + $0x68] sm:$0xff]
  %v703 = vld [vmem:[%s688 + $0x70] sm:$0xff]
  %v704 = vld [vmem:[%s688 + $0x78] sm:$0xff]
  %s705 = scalar_lea.vmem %s4, 6
  %v706 = vld [vmem:[%s705] sm:$0x1]
  %v708 = vlaneseq
  %v709 = vshrl.u32 %v708, 7
  %v710 = vsub.s32 0, %v709
  %v711 = vrot.slane %v706, %v710
  %713 = vmatprep.subr.mxu0 0.0
  %714 = vmatpush1.msra.mxu0 %v689
  %715 = vmatprep.subr.mxu0 0.0
  %716 = vmatpush1.msra.mxu0 %v690
  %717 = vmatprep.subr.mxu0 0.0
  %718 = vmatpush1.msra.mxu0 %v691
  %719 = vmatprep.subr.mxu0 0.0
  %720 = vmatpush1.msra.mxu0 %v692
  %721 = vmatprep.subr.mxu0 0.0
  %722 = vmatpush1.msra.mxu0 %v693
  %723 = vmatprep.subr.mxu0 0.0
  %724 = vmatpush1.msra.mxu0 %v694
  %725 = vmatprep.subr.mxu0 0.0
  %726 = vmatpush1.msra.mxu0 %v695
  %727 = vmatprep.subr.mxu0 0.0
  %728 = vmatpush1.msra.mxu0 %v696
  %729 = vmatprep.subr.mxu0 0.0
  %730 = vmatpush1.msra.mxu0 %v697
  %731 = vmatprep.subr.mxu0 0.0
  %732 = vmatpush1.msra.mxu0 %v698
  %733 = vmatprep.subr.mxu0 0.0
  %734 = vmatpush1.msra.mxu0 %v699
  %735 = vmatprep.subr.mxu0 0.0
  %736 = vmatpush1.msra.mxu0 %v700
  %737 = vmatprep.subr.mxu0 0.0
  %738 = vmatpush1.msra.mxu0 %v701
  %739 = vmatprep.subr.mxu0 0.0
  %740 = vmatpush1.msra.mxu0 %v702
  %741 = vmatprep.subr.mxu0 0.0
  %742 = vmatpush1.msra.mxu0 %v703
  %743 = vmatprep.subr.mxu0 0.0
  %744 = vmatpush1.msra.mxu0 %v704
  %745 = vmatprep.subr.mxu0 0.0
  %746 = vmatpush1.msra.mxu0 0.0
  %747 = vmatprep.subr.mxu0 0.0
  %748 = vmatpush1.msra.mxu0 0.0
  %749 = vmatprep.subr.mxu0 0.0
  %750 = vmatpush1.msra.mxu0 0.0
  %751 = vmatprep.subr.mxu0 0.0
  %752 = vmatpush1.msra.mxu0 0.0
  %753 = vmatprep.subr.mxu0 0.0
  %754 = vmatpush1.msra.mxu0 0.0
  %755 = vmatprep.subr.mxu0 0.0
  %756 = vmatpush1.msra.mxu0 0.0
  %757 = vmatprep.subr.mxu0 0.0
  %758 = vmatpush1.msra.mxu0 0.0
  %759 = vmatprep.subr.mxu0 0.0
  %760 = vmatpush1.msra.mxu0 0.0
  %761 = vmatprep.subr.mxu0 0.0
  %762 = vmatpush1.msra.mxu0 0.0
  %763 = vmatprep.subr.mxu0 0.0
  %764 = vmatpush1.msra.mxu0 0.0
  %765 = vmatprep.subr.mxu0 0.0
  %766 = vmatpush1.msra.mxu0 0.0
  %767 = vmatprep.subr.mxu0 0.0
  %768 = vmatpush1.msra.mxu0 0.0
  %769 = vmatprep.subr.mxu0 0.0
  %770 = vmatpush1.msra.mxu0 0.0
  %771 = vmatprep.subr.mxu0 0.0
  %772 = vmatpush1.msra.mxu0 0.0
  %773 = vmatprep.subr.mxu0 0.0
  %774 = vmatpush1.msra.mxu0 0.0
  %775 = vmatprep.subr.mxu0 0.0
  %776 = vmatpush1.msra.mxu0 0.0
  %777 = vmatprep.mubr.f32.mxu0 0.0
  %778 = vmatmul.mubr.f32.gmra.mrb[0].mxu0 %v685
  %v779 = vpop.f32.mrb[0].mxu0
  %v780 = vadd.f32 %v711, %v779
  %v781 = vpop.f32.mrb[0].mxu0
  %782 = vdwg.mxu0
  %s783 = scalar_lea.vmem %s3, 896
  %v784 = vld [vmem:[%s783] sm:$0xff]
  %v785 = vld [vmem:[%s783 + $0x8] sm:$0xff]
  %v786 = vld [vmem:[%s783 + $0x10] sm:$0xff]
  %v787 = vld [vmem:[%s783 + $0x18] sm:$0xff]
  %v788 = vld [vmem:[%s783 + $0x20] sm:$0xff]
  %v789 = vld [vmem:[%s783 + $0x28] sm:$0xff]
  %v790 = vld [vmem:[%s783 + $0x30] sm:$0xff]
  %v791 = vld [vmem:[%s783 + $0x38] sm:$0xff]
  %v792 = vld [vmem:[%s783 + $0x40] sm:$0xff]
  %v793 = vld [vmem:[%s783 + $0x48] sm:$0xff]
  %v794 = vld [vmem:[%s783 + $0x50] sm:$0xff]
  %v795 = vld [vmem:[%s783 + $0x58] sm:$0xff]
  %v796 = vld [vmem:[%s783 + $0x60] sm:$0xff]
  %v797 = vld [vmem:[%s783 + $0x68] sm:$0xff]
  %v798 = vld [vmem:[%s783 + $0x70] sm:$0xff]
  %v799 = vld [vmem:[%s783 + $0x78] sm:$0xff]
  %s800 = scalar_lea.vmem %s4, 7
  %v801 = vld [vmem:[%s800] sm:$0x1]
  %v803 = vlaneseq
  %v804 = vshrl.u32 %v803, 7
  %v805 = vsub.s32 0, %v804
  %v806 = vrot.slane %v801, %v805
  %808 = vmatprep.subr.mxu0 0.0
  %809 = vmatpush1.msra.mxu0 %v784
  %810 = vmatprep.subr.mxu0 0.0
  %811 = vmatpush1.msra.mxu0 %v785
  %812 = vmatprep.subr.mxu0 0.0
  %813 = vmatpush1.msra.mxu0 %v786
  %814 = vmatprep.subr.mxu0 0.0
  %815 = vmatpush1.msra.mxu0 %v787
  %816 = vmatprep.subr.mxu0 0.0
  %817 = vmatpush1.msra.mxu0 %v788
  %818 = vmatprep.subr.mxu0 0.0
  %819 = vmatpush1.msra.mxu0 %v789
  %820 = vmatprep.subr.mxu0 0.0
  %821 = vmatpush1.msra.mxu0 %v790
  %822 = vmatprep.subr.mxu0 0.0
  %823 = vmatpush1.msra.mxu0 %v791
  %824 = vmatprep.subr.mxu0 0.0
  %825 = vmatpush1.msra.mxu0 %v792
  %826 = vmatprep.subr.mxu0 0.0
  %827 = vmatpush1.msra.mxu0 %v793
  %828 = vmatprep.subr.mxu0 0.0
  %829 = vmatpush1.msra.mxu0 %v794
  %830 = vmatprep.subr.mxu0 0.0
  %831 = vmatpush1.msra.mxu0 %v795
  %832 = vmatprep.subr.mxu0 0.0
  %833 = vmatpush1.msra.mxu0 %v796
  %834 = vmatprep.subr.mxu0 0.0
  %835 = vmatpush1.msra.mxu0 %v797
  %836 = vmatprep.subr.mxu0 0.0
  %837 = vmatpush1.msra.mxu0 %v798
  %838 = vmatprep.subr.mxu0 0.0
  %839 = vmatpush1.msra.mxu0 %v799
  %840 = vmatprep.subr.mxu0 0.0
  %841 = vmatpush1.msra.mxu0 0.0
  %842 = vmatprep.subr.mxu0 0.0
  %843 = vmatpush1.msra.mxu0 0.0
  %844 = vmatprep.subr.mxu0 0.0
  %845 = vmatpush1.msra.mxu0 0.0
  %846 = vmatprep.subr.mxu0 0.0
  %847 = vmatpush1.msra.mxu0 0.0
  %848 = vmatprep.subr.mxu0 0.0
  %849 = vmatpush1.msra.mxu0 0.0
  %850 = vmatprep.subr.mxu0 0.0
  %851 = vmatpush1.msra.mxu0 0.0
  %852 = vmatprep.subr.mxu0 0.0
  %853 = vmatpush1.msra.mxu0 0.0
  %854 = vmatprep.subr.mxu0 0.0
  %855 = vmatpush1.msra.mxu0 0.0
  %856 = vmatprep.subr.mxu0 0.0
  %857 = vmatpush1.msra.mxu0 0.0
  %858 = vmatprep.subr.mxu0 0.0
  %859 = vmatpush1.msra.mxu0 0.0
  %860 = vmatprep.subr.mxu0 0.0
  %861 = vmatpush1.msra.mxu0 0.0
  %862 = vmatprep.subr.mxu0 0.0
  %863 = vmatpush1.msra.mxu0 0.0
  %864 = vmatprep.subr.mxu0 0.0
  %865 = vmatpush1.msra.mxu0 0.0
  %866 = vmatprep.subr.mxu0 0.0
  %867 = vmatpush1.msra.mxu0 0.0
  %868 = vmatprep.subr.mxu0 0.0
  %869 = vmatpush1.msra.mxu0 0.0
  %870 = vmatprep.subr.mxu0 0.0
  %871 = vmatpush1.msra.mxu0 0.0
  %872 = vmatprep.mubr.f32.mxu0 0.0
  %873 = vmatmul.mubr.f32.gmra.mrb[0].mxu0 %v780
  %v874 = vpop.f32.mrb[0].mxu0
  %v875 = vadd.f32 %v806, %v874
  %v876 = vpop.f32.mrb[0].mxu0
  %877 = vdwg.mxu0
  %s878 = scalar_lea.vmem %s3, 1024
  %v879 = vld [vmem:[%s878] sm:$0xff]
  %v880 = vld [vmem:[%s878 + $0x8] sm:$0xff]
  %v881 = vld [vmem:[%s878 + $0x10] sm:$0xff]
  %v882 = vld [vmem:[%s878 + $0x18] sm:$0xff]
  %v883 = vld [vmem:[%s878 + $0x20] sm:$0xff]
  %v884 = vld [vmem:[%s878 + $0x28] sm:$0xff]
  %v885 = vld [vmem:[%s878 + $0x30] sm:$0xff]
  %v886 = vld [vmem:[%s878 + $0x38] sm:$0xff]
  %v887 = vld [vmem:[%s878 + $0x40] sm:$0xff]
  %v888 = vld [vmem:[%s878 + $0x48] sm:$0xff]
  %v889 = vld [vmem:[%s878 + $0x50] sm:$0xff]
  %v890 = vld [vmem:[%s878 + $0x58] sm:$0xff]
  %v891 = vld [vmem:[%s878 + $0x60] sm:$0xff]
  %v892 = vld [vmem:[%s878 + $0x68] sm:$0xff]
  %v893 = vld [vmem:[%s878 + $0x70] sm:$0xff]
  %v894 = vld [vmem:[%s878 + $0x78] sm:$0xff]
  %s895 = scalar_lea.vmem %s4, 8
  %v896 = vld [vmem:[%s895] sm:$0x1]
  %v898 = vlaneseq
  %v899 = vshrl.u32 %v898, 7
  %v900 = vsub.s32 0, %v899
  %v901 = vrot.slane %v896, %v900
  %903 = vmatprep.subr.mxu0 0.0
  %904 = vmatpush1.msra.mxu0 %v879
  %905 = vmatprep.subr.mxu0 0.0
  %906 = vmatpush1.msra.mxu0 %v880
  %907 = vmatprep.subr.mxu0 0.0
  %908 = vmatpush1.msra.mxu0 %v881
  %909 = vmatprep.subr.mxu0 0.0
  %910 = vmatpush1.msra.mxu0 %v882
  %911 = vmatprep.subr.mxu0 0.0
  %912 = vmatpush1.msra.mxu0 %v883
  %913 = vmatprep.subr.mxu0 0.0
  %914 = vmatpush1.msra.mxu0 %v884
  %915 = vmatprep.subr.mxu0 0.0
  %916 = vmatpush1.msra.mxu0 %v885
  %917 = vmatprep.subr.mxu0 0.0
  %918 = vmatpush1.msra.mxu0 %v886
  %919 = vmatprep.subr.mxu0 0.0
  %920 = vmatpush1.msra.mxu0 %v887
  %921 = vmatprep.subr.mxu0 0.0
  %922 = vmatpush1.msra.mxu0 %v888
  %923 = vmatprep.subr.mxu0 0.0
  %924 = vmatpush1.msra.mxu0 %v889
  %925 = vmatprep.subr.mxu0 0.0
  %926 = vmatpush1.msra.mxu0 %v890
  %927 = vmatprep.subr.mxu0 0.0
  %928 = vmatpush1.msra.mxu0 %v891
  %929 = vmatprep.subr.mxu0 0.0
  %930 = vmatpush1.msra.mxu0 %v892
  %931 = vmatprep.subr.mxu0 0.0
  %932 = vmatpush1.msra.mxu0 %v893
  %933 = vmatprep.subr.mxu0 0.0
  %934 = vmatpush1.msra.mxu0 %v894
  %935 = vmatprep.subr.mxu0 0.0
  %936 = vmatpush1.msra.mxu0 0.0
  %937 = vmatprep.subr.mxu0 0.0
  %938 = vmatpush1.msra.mxu0 0.0
  %939 = vmatprep.subr.mxu0 0.0
  %940 = vmatpush1.msra.mxu0 0.0
  %941 = vmatprep.subr.mxu0 0.0
  %942 = vmatpush1.msra.mxu0 0.0
  %943 = vmatprep.subr.mxu0 0.0
  %944 = vmatpush1.msra.mxu0 0.0
  %945 = vmatprep.subr.mxu0 0.0
  %946 = vmatpush1.msra.mxu0 0.0
  %947 = vmatprep.subr.mxu0 0.0
  %948 = vmatpush1.msra.mxu0 0.0
  %949 = vmatprep.subr.mxu0 0.0
  %950 = vmatpush1.msra.mxu0 0.0
  %951 = vmatprep.subr.mxu0 0.0
  %952 = vmatpush1.msra.mxu0 0.0
  %953 = vmatprep.subr.mxu0 0.0
  %954 = vmatpush1.msra.mxu0 0.0
  %955 = vmatprep.subr.mxu0 0.0
  %956 = vmatpush1.msra.mxu0 0.0
  %957 = vmatprep.subr.mxu0 0.0
  %958 = vmatpush1.msra.mxu0 0.0
  %959 = vmatprep.subr.mxu0 0.0
  %960 = vmatpush1.msra.mxu0 0.0
  %961 = vmatprep.subr.mxu0 0.0
  %962 = vmatpush1.msra.mxu0 0.0
  %963 = vmatprep.subr.mxu0 0.0
  %964 = vmatpush1.msra.mxu0 0.0
  %965 = vmatprep.subr.mxu0 0.0
  %966 = vmatpush1.msra.mxu0 0.0
  %967 = vmatprep.mubr.f32.mxu0 0.0
  %968 = vmatmul.mubr.f32.gmra.mrb[0].mxu0 %v875
  %v969 = vpop.f32.mrb[0].mxu0
  %v970 = vadd.f32 %v901, %v969
  %v971 = vpop.f32.mrb[0].mxu0
  %972 = vdwg.mxu0
  %s973 = scalar_lea.vmem %s3, 1152
  %v974 = vld [vmem:[%s973] sm:$0xff]
  %v975 = vld [vmem:[%s973 + $0x8] sm:$0xff]
  %v976 = vld [vmem:[%s973 + $0x10] sm:$0xff]
  %v977 = vld [vmem:[%s973 + $0x18] sm:$0xff]
  %v978 = vld [vmem:[%s973 + $0x20] sm:$0xff]
  %v979 = vld [vmem:[%s973 + $0x28] sm:$0xff]
  %v980 = vld [vmem:[%s973 + $0x30] sm:$0xff]
  %v981 = vld [vmem:[%s973 + $0x38] sm:$0xff]
  %v982 = vld [vmem:[%s973 + $0x40] sm:$0xff]
  %v983 = vld [vmem:[%s973 + $0x48] sm:$0xff]
  %v984 = vld [vmem:[%s973 + $0x50] sm:$0xff]
  %v985 = vld [vmem:[%s973 + $0x58] sm:$0xff]
  %v986 = vld [vmem:[%s973 + $0x60] sm:$0xff]
  %v987 = vld [vmem:[%s973 + $0x68] sm:$0xff]
  %v988 = vld [vmem:[%s973 + $0x70] sm:$0xff]
  %v989 = vld [vmem:[%s973 + $0x78] sm:$0xff]
  %s990 = scalar_lea.vmem %s4, 9
  %v991 = vld [vmem:[%s990] sm:$0x1]
  %v993 = vlaneseq
  %v994 = vshrl.u32 %v993, 7
  %v995 = vsub.s32 0, %v994
  %v996 = vrot.slane %v991, %v995
  %998 = vmatprep.subr.mxu0 0.0
  %999 = vmatpush1.msra.mxu0 %v974
  %1000 = vmatprep.subr.mxu0 0.0
  %1001 = vmatpush1.msra.mxu0 %v975
  %1002 = vmatprep.subr.mxu0 0.0
  %1003 = vmatpush1.msra.mxu0 %v976
  %1004 = vmatprep.subr.mxu0 0.0
  %1005 = vmatpush1.msra.mxu0 %v977
  %1006 = vmatprep.subr.mxu0 0.0
  %1007 = vmatpush1.msra.mxu0 %v978
  %1008 = vmatprep.subr.mxu0 0.0
  %1009 = vmatpush1.msra.mxu0 %v979
  %1010 = vmatprep.subr.mxu0 0.0
  %1011 = vmatpush1.msra.mxu0 %v980
  %1012 = vmatprep.subr.mxu0 0.0
  %1013 = vmatpush1.msra.mxu0 %v981
  %1014 = vmatprep.subr.mxu0 0.0
  %1015 = vmatpush1.msra.mxu0 %v982
  %1016 = vmatprep.subr.mxu0 0.0
  %1017 = vmatpush1.msra.mxu0 %v983
  %1018 = vmatprep.subr.mxu0 0.0
  %1019 = vmatpush1.msra.mxu0 %v984
  %1020 = vmatprep.subr.mxu0 0.0
  %1021 = vmatpush1.msra.mxu0 %v985
  %1022 = vmatprep.subr.mxu0 0.0
  %1023 = vmatpush1.msra.mxu0 %v986
  %1024 = vmatprep.subr.mxu0 0.0
  %1025 = vmatpush1.msra.mxu0 %v987
  %1026 = vmatprep.subr.mxu0 0.0
  %1027 = vmatpush1.msra.mxu0 %v988
  %1028 = vmatprep.subr.mxu0 0.0
  %1029 = vmatpush1.msra.mxu0 %v989
  %1030 = vmatprep.subr.mxu0 0.0
  %1031 = vmatpush1.msra.mxu0 0.0
  %1032 = vmatprep.subr.mxu0 0.0
  %1033 = vmatpush1.msra.mxu0 0.0
  %1034 = vmatprep.subr.mxu0 0.0
  %1035 = vmatpush1.msra.mxu0 0.0
  %1036 = vmatprep.subr.mxu0 0.0
  %1037 = vmatpush1.msra.mxu0 0.0
  %1038 = vmatprep.subr.mxu0 0.0
  %1039 = vmatpush1.msra.mxu0 0.0
  %1040 = vmatprep.subr.mxu0 0.0
  %1041 = vmatpush1.msra.mxu0 0.0
  %1042 = vmatprep.subr.mxu0 0.0
  %1043 = vmatpush1.msra.mxu0 0.0
  %1044 = vmatprep.subr.mxu0 0.0
  %1045 = vmatpush1.msra.mxu0 0.0
  %1046 = vmatprep.subr.mxu0 0.0
  %1047 = vmatpush1.msra.mxu0 0.0
  %1048 = vmatprep.subr.mxu0 0.0
  %1049 = vmatpush1.msra.mxu0 0.0
  %1050 = vmatprep.subr.mxu0 0.0
  %1051 = vmatpush1.msra.mxu0 0.0
  %1052 = vmatprep.subr.mxu0 0.0
  %1053 = vmatpush1.msra.mxu0 0.0
  %1054 = vmatprep.subr.mxu0 0.0
  %1055 = vmatpush1.msra.mxu0 0.0
  %1056 = vmatprep.subr.mxu0 0.0
  %1057 = vmatpush1.msra.mxu0 0.0
  %1058 = vmatprep.subr.mxu0 0.0
  %1059 = vmatpush1.msra.mxu0 0.0
  %1060 = vmatprep.subr.mxu0 0.0
  %1061 = vmatpush1.msra.mxu0 0.0
  %1062 = vmatprep.mubr.f32.mxu0 0.0
  %1063 = vmatmul.mubr.f32.gmra.mrb[0].mxu0 %v970
  %v1064 = vpop.f32.mrb[0].mxu0
  %v1065 = vadd.f32 %v996, %v1064
  %v1066 = vpop.f32.mrb[0].mxu0
  %1067 = vdwg.mxu0
  %v1068 = vld [vmem:[%s5] sm:$0xff]
  %v1069 = vld [vmem:[%s5 + $0x8] sm:$0xff]
  %v1070 = vld [vmem:[%s5 + $0x10] sm:$0xff]
  %v1071 = vld [vmem:[%s5 + $0x18] sm:$0xff]
  %v1072 = vld [vmem:[%s5 + $0x20] sm:$0xff]
  %v1073 = vld [vmem:[%s5 + $0x28] sm:$0xff]
  %v1074 = vld [vmem:[%s5 + $0x30] sm:$0xff]
  %v1075 = vld [vmem:[%s5 + $0x38] sm:$0xff]
  %v1076 = vld [vmem:[%s5 + $0x40] sm:$0xff]
  %v1077 = vld [vmem:[%s5 + $0x48] sm:$0xff]
  %v1078 = vld [vmem:[%s5 + $0x50] sm:$0xff]
  %v1079 = vld [vmem:[%s5 + $0x58] sm:$0xff]
  %v1080 = vld [vmem:[%s5 + $0x60] sm:$0xff]
  %v1081 = vld [vmem:[%s5 + $0x68] sm:$0xff]
  %v1082 = vld [vmem:[%s5 + $0x70] sm:$0xff]
  %v1083 = vld [vmem:[%s5 + $0x78] sm:$0xff]
  %v1084 = vld [vmem:[%s6] sm:$0x1]
  %v1086 = vlaneseq
  %v1087 = vshrl.u32 %v1086, 7
  %v1088 = vsub.s32 0, %v1087
  %v1089 = vrot.slane %v1084, %v1088
  %1091 = vmatprep.subr.mxu0 0.0
  %1092 = vmatpush1.msra.mxu0 %v1068
  %1093 = vmatprep.subr.mxu0 0.0
  %1094 = vmatpush1.msra.mxu0 %v1069
  %1095 = vmatprep.subr.mxu0 0.0
  %1096 = vmatpush1.msra.mxu0 %v1070
  %1097 = vmatprep.subr.mxu0 0.0
  %1098 = vmatpush1.msra.mxu0 %v1071
  %1099 = vmatprep.subr.mxu0 0.0
  %1100 = vmatpush1.msra.mxu0 %v1072
  %1101 = vmatprep.subr.mxu0 0.0
  %1102 = vmatpush1.msra.mxu0 %v1073
  %1103 = vmatprep.subr.mxu0 0.0
  %1104 = vmatpush1.msra.mxu0 %v1074
  %1105 = vmatprep.subr.mxu0 0.0
  %1106 = vmatpush1.msra.mxu0 %v1075
  %1107 = vmatprep.subr.mxu0 0.0
  %1108 = vmatpush1.msra.mxu0 %v1076
  %1109 = vmatprep.subr.mxu0 0.0
  %1110 = vmatpush1.msra.mxu0 %v1077
  %1111 = vmatprep.subr.mxu0 0.0
  %1112 = vmatpush1.msra.mxu0 %v1078
  %1113 = vmatprep.subr.mxu0 0.0
  %1114 = vmatpush1.msra.mxu0 %v1079
  %1115 = vmatprep.subr.mxu0 0.0
  %1116 = vmatpush1.msra.mxu0 %v1080
  %1117 = vmatprep.subr.mxu0 0.0
  %1118 = vmatpush1.msra.mxu0 %v1081
  %1119 = vmatprep.subr.mxu0 0.0
  %1120 = vmatpush1.msra.mxu0 %v1082
  %1121 = vmatprep.subr.mxu0 0.0
  %1122 = vmatpush1.msra.mxu0 %v1083
  %1123 = vmatprep.subr.mxu0 0.0
  %1124 = vmatpush1.msra.mxu0 0.0
  %1125 = vmatprep.subr.mxu0 0.0
  %1126 = vmatpush1.msra.mxu0 0.0
  %1127 = vmatprep.subr.mxu0 0.0
  %1128 = vmatpush1.msra.mxu0 0.0
  %1129 = vmatprep.subr.mxu0 0.0
  %1130 = vmatpush1.msra.mxu0 0.0
  %1131 = vmatprep.subr.mxu0 0.0
  %1132 = vmatpush1.msra.mxu0 0.0
  %1133 = vmatprep.subr.mxu0 0.0
  %1134 = vmatpush1.msra.mxu0 0.0
  %1135 = vmatprep.subr.mxu0 0.0
  %1136 = vmatpush1.msra.mxu0 0.0
  %1137 = vmatprep.subr.mxu0 0.0
  %1138 = vmatpush1.msra.mxu0 0.0
  %1139 = vmatprep.subr.mxu0 0.0
  %1140 = vmatpush1.msra.mxu0 0.0
  %1141 = vmatprep.subr.mxu0 0.0
  %1142 = vmatpush1.msra.mxu0 0.0
  %1143 = vmatprep.subr.mxu0 0.0
  %1144 = vmatpush1.msra.mxu0 0.0
  %1145 = vmatprep.subr.mxu0 0.0
  %1146 = vmatpush1.msra.mxu0 0.0
  %1147 = vmatprep.subr.mxu0 0.0
  %1148 = vmatpush1.msra.mxu0 0.0
  %1149 = vmatprep.subr.mxu0 0.0
  %1150 = vmatpush1.msra.mxu0 0.0
  %1151 = vmatprep.subr.mxu0 0.0
  %1152 = vmatpush1.msra.mxu0 0.0
  %1153 = vmatprep.subr.mxu0 0.0
  %1154 = vmatpush1.msra.mxu0 0.0
  %1155 = vmatprep.mubr.f32.mxu0 0.0
  %1156 = vmatmul.mubr.f32.gmra.mrb[0].mxu0 %v1065
  %v1157 = vpop.f32.mrb[0].mxu0
  %v1158 = vadd.f32 %v1089, %v1157
  %v1159 = vpop.f32.mrb[0].mxu0
  %1160 = vdwg.mxu0
  %1161 = vst [vmem:[%s7] sm:$0xff] %v1158
  // Predicated region
  $region30: #{deep_regression.1} parent=0 // pred_check
    _
  $region31: #{deep_regression.1} parent=0 // pred_check_branch
    %1163 = sbr.rel (0) target = $region33
  $region32: #{deep_regression.1} parent=0 // pred_region
    _
  $region33: #{deep_regression.1} parent=0 // pred_fallthru
    _
  // Predicated region
  $region34: #{deep_regression.1} parent=0 // pred_check
    _
  $region35: #{deep_regression.1} parent=0 // pred_check_branch
    %1165 = sbr.rel (0) target = $region37
  $region36: #{deep_regression.1} parent=0 // pred_region
    _
  $region37: #{deep_regression.1} parent=0 // pred_fallthru
    _

</llo_original>
